<compile_context>
chip_gen: v7x
topology: tpu7x:2x2x1
jax: 0.10.0
libtpu: 0.0.40
codegen_flags: <defaults>
</compile_context>

<pallas_src>
import functools

import jax
import jax.numpy as jnp
from jax.experimental import pallas as pl
from jax.experimental.pallas import tpu as pltpu


def _round_up(n: int, m: int) -> int:
    return ((n + m - 1) // m) * m


def _cdiv(a: int, b: int) -> int:
    return (a + b - 1) // b


def decoder_kernel(x_ref, w1_ref, b1_ref, w2_ref, b2_ref, w3_ref, b3_ref, o_ref):
    # x arrives as raw f32 straight from HBM (no wrapper-side pad/cast pass);
    # the bf16 cast is free VPU work under a memory-bound roofline.
    x = x_ref[...].astype(jnp.bfloat16)
    # Layer 1: (TB, 32)bf16 @ (32, 64)bf16 -> f32 accum, +bias, ReLU
    h1 = jnp.dot(x, w1_ref[...], preferred_element_type=jnp.float32)
    h1 = jnp.maximum(h1 + b1_ref[...], 0.0)
    # Layer 2: (TB, 64)bf16 @ (64, 128)bf16 -> f32 accum, +bias, ReLU
    h2 = jnp.dot(h1.astype(jnp.bfloat16), w2_ref[...],
                 preferred_element_type=jnp.float32)
    h2 = jnp.maximum(h2 + b2_ref[...], 0.0)
    # Layer 3: (TB, 128)bf16 @ (128, out_pad)bf16 -> f32 accum, +bias
    z = jnp.dot(h2.astype(jnp.bfloat16), w3_ref[...],
                preferred_element_type=jnp.float32)
    z = z + b3_ref[...]
    # sigmoid(z) = 0.5 * (tanh(z/2) + 1): single EUP transcendental, no divide.
    o_ref[...] = (0.5 * (jnp.tanh(0.5 * z) + 1.0)).astype(o_ref.dtype)


def _decoder_pallas(x, w1, b1, w2, b2, w3, b3, *, block_b, out_dtype):
    bp, in_dim = x.shape
    out_pad = w3.shape[1]
    grid = (bp // block_b,)

    resident = lambda shape: pl.BlockSpec(shape, lambda i: (0, 0))

    # Size the VMEM cap from the actual buffers (double-buffered x/out tiles +
    # resident weights), with generous headroom, instead of a blanket 48 MiB.
    weight_bytes = (w1.size * 2 + w2.size * 2 + w3.size * 2
                    + (b1.size + b2.size + b3.size) * 4)
    tile_bytes = (2 * block_b * in_dim * x.dtype.itemsize
                  + 2 * block_b * out_pad * jnp.dtype(out_dtype).itemsize
                  + weight_bytes)
    vmem_limit = int(min(64 * 1024 * 1024, max(16 * 1024 * 1024, 4 * tile_bytes)))

    return pl.pallas_call(
        decoder_kernel,
        out_shape=jax.ShapeDtypeStruct((bp, out_pad), out_dtype),
        grid_spec=pltpu.PrefetchScalarGridSpec(
            num_scalar_prefetch=0,
            grid=grid,
            in_specs=[
                pl.BlockSpec((block_b, in_dim), lambda i: (i, 0)),  # x tile (f32)
                resident((in_dim, 64)),    # W1 (bf16)
                resident((1, 64)),         # b1 (f32)
                resident((64, 128)),       # W2 (bf16)
                resident((1, 128)),        # b2 (f32)
                resident((128, out_pad)),  # W3 (bf16, lane-padded)
                resident((1, out_pad)),    # b3 (f32, lane-padded)
            ],
            out_specs=pl.BlockSpec((block_b, out_pad), lambda i: (i, 0)),
        ),
        compiler_params=pltpu.CompilerParams(
            dimension_semantics=("parallel",),   # megacore-shardable on v7x
            vmem_limit_bytes=vmem_limit,
        ),
    )(x, w1, b1, w2, b2, w3, b3)


def prepare_decoder_params(w1, b1, w2, b2, w3, b3):
    """One-time weight prep (hoisted out of the hot path): bf16 cast + lane
    padding of the last layer to a multiple of 128."""
    out_dim = w3.shape[1]
    out_pad = _round_up(out_dim, 128)
    params = {
        "w1": w1.astype(jnp.bfloat16),
        "b1": jnp.asarray(b1, jnp.float32).reshape(1, -1),
        "w2": w2.astype(jnp.bfloat16),
        "b2": jnp.asarray(b2, jnp.float32).reshape(1, -1),
        "w3": jnp.pad(w3, ((0, 0), (0, out_pad - out_dim))).astype(jnp.bfloat16),
        "b3": jnp.pad(jnp.asarray(b3, jnp.float32).reshape(1, -1),
                      ((0, 0), (0, out_pad - out_dim))),
    }
    return params, out_dim


@functools.partial(jax.jit, static_argnames=("out_dim", "block_b", "out_dtype"))
def decoder_forward(x, params, *, out_dim, block_b=1024, out_dtype=jnp.bfloat16):
    """x: (B, 32) f32. Returns (B, out_dim) in `out_dtype` (default bf16 —
    explicit API decision per the perf review; pass jnp.float32 for an exact
    match of the PyTorch module's output dtype)."""
    B, in_dim = x.shape
    assert in_dim == 32
    out_pad = params["w3"].shape[1]

    # Balanced batch tiling: choose the tile count first, then size each tile
    # (multiple of 16 for bf16 sublane packing) so padding is <16 rows/tile.
    n_tiles = max(1, _cdiv(B, block_b))
    eff_block = _round_up(_cdiv(B, n_tiles), 16)
    bp = _round_up(B, eff_block)

    # Pad the batch only when actually needed (no wrapper-side cast pass; the
    # kernel reads f32 x directly and casts on-chip).
    x_in = x if bp == B else jnp.pad(x, ((0, bp - B), (0, 0)))

    out = _decoder_pallas(
        x_in, params["w1"], params["b1"], params["w2"], params["b2"],
        params["w3"], params["b3"], block_b=eff_block, out_dtype=out_dtype)

    # Gate the slice: identity (free) when already aligned; only ragged shapes
    # pay for the extra copy. Padded rows/cols hold sigmoid(pad) values and are
    # dropped here.
    if bp != B or out_pad != out_dim:
        out = out[:B, :out_dim]
    return out


def init_linear(key, fan_in, fan_out):
    """Deterministic PyTorch-style init: U(-1/sqrt(fan_in), 1/sqrt(fan_in))."""
    kw, kb = jax.random.split(key)
    bound = 1.0 / jnp.sqrt(float(fan_in))
    w = jax.random.uniform(kw, (fan_in, fan_out), jnp.float32, -bound, bound)
    b = jax.random.uniform(kb, (1, fan_out), jnp.float32, -bound, bound)
    return w, b


def reference_forward_f32(x, w1, b1, w2, b2, w3, b3):
    h1 = jnp.maximum(x @ w1 + b1, 0.0)
    h2 = jnp.maximum(h1 @ w2 + b2, 0.0)
    return jax.nn.sigmoid(h2 @ w3 + b3)


if __name__ == "__main__":
    key = jax.random.PRNGKey(0)
    kx1, kx2, k1, k2, k3 = jax.random.split(key, 5)

    # Small deterministic test cases:
    #   case A: aligned output (out multiple of 128), bf16 output path
    #   case B: ragged shapes (batch + output-lane padding + slice), f32 output
    cases = [
        (jax.random.normal(kx1, (8, 32), jnp.float32), 256, jnp.bfloat16),
        (jax.random.normal(kx2, (13, 32), jnp.float32), 200, jnp.float32),
    ]

    for x, output_size, out_dtype in cases:
        w1, b1 = init_linear(k1, 32, 64)
        w2, b2 = init_linear(k2, 64, 128)
        w3, b3 = init_linear(k3, 128, output_size)

        params, out_dim = prepare_decoder_params(w1, b1, w2, b2, w3, b3)
        out = decoder_forward(x, params, out_dim=out_dim, block_b=1024,
                              out_dtype=out_dtype)
        out = jax.block_until_ready(out)

        ref = reference_forward_f32(x, w1, b1, w2, b2, w3, b3)
        assert out.shape == (x.shape[0], output_size)
        assert out.dtype == out_dtype
        # bf16 matmul operands + f32 accumulation (+ bf16 output quantization
        # in case A); sigmoid output bounded in [0, 1], so compare with a
        # relaxed absolute tolerance against the pure-f32 reference.
        assert jnp.allclose(out.astype(jnp.float32), ref, atol=2e-2, rtol=0.0), \
            "mismatch vs reference"

    print("KERNEL_OK")
</pallas_src>

<mosaic_0001>
module attributes {stable_mosaic.version = 11 : i64} {
  func.func @decoder_kernel(%arg0: i32, %arg1: memref<16x32xf32, #tpu.memory_space<vmem>>, %arg2: memref<32x64xbf16, #tpu.memory_space<vmem>>, %arg3: memref<1x64xf32, #tpu.memory_space<vmem>>, %arg4: memref<64x128xbf16, #tpu.memory_space<vmem>>, %arg5: memref<1x128xf32, #tpu.memory_space<vmem>>, %arg6: memref<128x256xbf16, #tpu.memory_space<vmem>>, %arg7: memref<1x256xf32, #tpu.memory_space<vmem>>, %arg8: memref<16x256xbf16, #tpu.memory_space<vmem>>) attributes {dimension_semantics = [#tpu.dimension_semantics<parallel>], iteration_bounds = array<i64: 1>, scalar_prefetch = 0 : i64, scratch_operands = 0 : i64, tpu.core_type = #tpu.core_type<tc>, window_params = [{transform_indices = @transform_0, window_bounds = array<i64: 16, 32>}, {pipeline_mode = #tpu.pipeline_mode<synchronous>, transform_indices = @transform_1, window_bounds = array<i64: 32, 64>}, {pipeline_mode = #tpu.pipeline_mode<synchronous>, transform_indices = @transform_2, window_bounds = array<i64: 1, 64>}, {pipeline_mode = #tpu.pipeline_mode<synchronous>, transform_indices = @transform_3, window_bounds = array<i64: 64, 128>}, {pipeline_mode = #tpu.pipeline_mode<synchronous>, transform_indices = @transform_4, window_bounds = array<i64: 1, 128>}, {pipeline_mode = #tpu.pipeline_mode<synchronous>, transform_indices = @transform_5, window_bounds = array<i64: 128, 256>}, {pipeline_mode = #tpu.pipeline_mode<synchronous>, transform_indices = @transform_6, window_bounds = array<i64: 1, 256>}, {transform_indices = @transform_7, window_bounds = array<i64: 16, 256>}]} {
    %c0 = arith.constant 0 : index
    %c0_0 = arith.constant 0 : index
    %0 = vector.load %arg1[%c0, %c0_0] : memref<16x32xf32, #tpu.memory_space<vmem>>, vector<16x32xf32>
    %1 = arith.truncf %0 : vector<16x32xf32> to vector<16x32xbf16>
    %c0_1 = arith.constant 0 : index
    %c0_2 = arith.constant 0 : index
    %2 = vector.load %arg2[%c0_1, %c0_2] : memref<32x64xbf16, #tpu.memory_space<vmem>>, vector<32x64xbf16>
    %cst = arith.constant dense<0.000000e+00> : vector<16x64xf32>
    %3 = tpu.matmul %1, %2, %cst {dimension_numbers = #tpu.dot_dimension_numbers<[1], [0], [0], [1], [0, 0, 1, 1], [], []>} : vector<16x32xbf16>, vector<32x64xbf16>, vector<16x64xf32> -> vector<16x64xf32>
    %c0_3 = arith.constant 0 : index
    %c0_4 = arith.constant 0 : index
    %4 = vector.load %arg3[%c0_3, %c0_4] : memref<1x64xf32, #tpu.memory_space<vmem>>, vector<1x64xf32>
    %5 = vector.broadcast %4 : vector<1x64xf32> to vector<16x64xf32>
    %6 = arith.addf %3, %5 : vector<16x64xf32>
    %cst_5 = arith.constant 0.000000e+00 : f32
    %7 = vector.broadcast %cst_5 : f32 to vector<16x64xf32>
    %8 = arith.maximumf %6, %7 : vector<16x64xf32>
    %9 = arith.truncf %8 : vector<16x64xf32> to vector<16x64xbf16>
    %c0_6 = arith.constant 0 : index
    %c0_7 = arith.constant 0 : index
    %10 = vector.load %arg4[%c0_6, %c0_7] : memref<64x128xbf16, #tpu.memory_space<vmem>>, vector<64x128xbf16>
    %cst_8 = arith.constant dense<0.000000e+00> : vector<16x128xf32>
    %11 = tpu.matmul %9, %10, %cst_8 {dimension_numbers = #tpu.dot_dimension_numbers<[1], [0], [0], [1], [0, 0, 1, 1], [], []>} : vector<16x64xbf16>, vector<64x128xbf16>, vector<16x128xf32> -> vector<16x128xf32>
    %c0_9 = arith.constant 0 : index
    %c0_10 = arith.constant 0 : index
    %12 = vector.load %arg5[%c0_9, %c0_10] : memref<1x128xf32, #tpu.memory_space<vmem>>, vector<1x128xf32>
    %13 = vector.broadcast %12 : vector<1x128xf32> to vector<16x128xf32>
    %14 = arith.addf %11, %13 : vector<16x128xf32>
    %cst_11 = arith.constant 0.000000e+00 : f32
    %15 = vector.broadcast %cst_11 : f32 to vector<16x128xf32>
    %16 = arith.maximumf %14, %15 : vector<16x128xf32>
    %17 = arith.truncf %16 : vector<16x128xf32> to vector<16x128xbf16>
    %c0_12 = arith.constant 0 : index
    %c0_13 = arith.constant 0 : index
    %18 = vector.load %arg6[%c0_12, %c0_13] : memref<128x256xbf16, #tpu.memory_space<vmem>>, vector<128x256xbf16>
    %cst_14 = arith.constant dense<0.000000e+00> : vector<16x256xf32>
    %19 = tpu.matmul %17, %18, %cst_14 {dimension_numbers = #tpu.dot_dimension_numbers<[1], [0], [0], [1], [0, 0, 1, 1], [], []>} : vector<16x128xbf16>, vector<128x256xbf16>, vector<16x256xf32> -> vector<16x256xf32>
    %c0_15 = arith.constant 0 : index
    %c0_16 = arith.constant 0 : index
    %20 = vector.load %arg7[%c0_15, %c0_16] : memref<1x256xf32, #tpu.memory_space<vmem>>, vector<1x256xf32>
    %21 = vector.broadcast %20 : vector<1x256xf32> to vector<16x256xf32>
    %22 = arith.addf %19, %21 : vector<16x256xf32>
    %cst_17 = arith.constant 5.000000e-01 : f32
    %23 = vector.broadcast %cst_17 : f32 to vector<16x256xf32>
    %24 = arith.mulf %23, %22 : vector<16x256xf32>
    %25 = math.tanh %24 : vector<16x256xf32>
    %cst_18 = arith.constant 1.000000e+00 : f32
    %26 = vector.broadcast %cst_18 : f32 to vector<16x256xf32>
    %27 = arith.addf %25, %26 : vector<16x256xf32>
    %cst_19 = arith.constant 5.000000e-01 : f32
    %28 = vector.broadcast %cst_19 : f32 to vector<16x256xf32>
    %29 = arith.mulf %28, %27 : vector<16x256xf32>
    %30 = arith.truncf %29 : vector<16x256xf32> to vector<16x256xbf16>
    %c0_20 = arith.constant 0 : index
    %c0_21 = arith.constant 0 : index
    %31 = vector.load %arg8[%c0_20, %c0_21] : memref<16x256xbf16, #tpu.memory_space<vmem>>, vector<16x256xbf16>
    tpu.vector_store %arg8[%c0_20, %c0_21], %30 {strides = array<i32>} : memref<16x256xbf16, #tpu.memory_space<vmem>>, vector<16x256xbf16>,
    return
  }
  func.func @transform_0(%arg0: i32) -> (i32, i32) {
    %c0_i32 = arith.constant 0 : i32
    %c0_i32_0 = arith.constant 0 : i32
    return %arg0, %c0_i32 : i32, i32
  }
  func.func @transform_1(%arg0: i32) -> (i32, i32) {
    %c0_i32 = arith.constant 0 : i32
    %c0_i32_0 = arith.constant 0 : i32
    %c0_i32_1 = arith.constant 0 : i32
    return %c0_i32, %c0_i32_0 : i32, i32
  }
  func.func @transform_2(%arg0: i32) -> (i32, i32) {
    %c0_i32 = arith.constant 0 : i32
    %c0_i32_0 = arith.constant 0 : i32
    %c0_i32_1 = arith.constant 0 : i32
    return %c0_i32, %c0_i32_0 : i32, i32
  }
  func.func @transform_3(%arg0: i32) -> (i32, i32) {
    %c0_i32 = arith.constant 0 : i32
    %c0_i32_0 = arith.constant 0 : i32
    %c0_i32_1 = arith.constant 0 : i32
    return %c0_i32, %c0_i32_0 : i32, i32
  }
  func.func @transform_4(%arg0: i32) -> (i32, i32) {
    %c0_i32 = arith.constant 0 : i32
    %c0_i32_0 = arith.constant 0 : i32
    %c0_i32_1 = arith.constant 0 : i32
    return %c0_i32, %c0_i32_0 : i32, i32
  }
  func.func @transform_5(%arg0: i32) -> (i32, i32) {
    %c0_i32 = arith.constant 0 : i32
    %c0_i32_0 = arith.constant 0 : i32
    %c0_i32_1 = arith.constant 0 : i32
    return %c0_i32, %c0_i32_0 : i32, i32
  }
  func.func @transform_6(%arg0: i32) -> (i32, i32) {
    %c0_i32 = arith.constant 0 : i32
    %c0_i32_0 = arith.constant 0 : i32
    %c0_i32_1 = arith.constant 0 : i32
    return %c0_i32, %c0_i32_0 : i32, i32
  }
  func.func @transform_7(%arg0: i32) -> (i32, i32) {
    %c0_i32 = arith.constant 0 : i32
    %c0_i32_0 = arith.constant 0 : i32
    return %arg0, %c0_i32 : i32, i32
  }
}

</mosaic_0001>

<llo_original>
// kernel: decoder_forward.1
$region0: #{decoder_forward.1}
  #allocation0 [shape = 'u32[]', space=smem, size = 0x4, offset = 0x4, fixed_abs, tag = 'smem constant byte address 0x4 - core index']
  #allocation1 [shape = 'u32[144,128]{1,0:T(1,128)}', space=vmem, size = 0x12000, scoped, tag = 'internal scratch']
  %s0 = inlined_call_operand.vmem [shape: f32[16,32], index: 0, kind: input, shape index: {}]
  %s1 = inlined_call_operand.hbm [shape: bf16[32,64], index: 1, kind: input, shape index: {}]
  %s2 = inlined_call_operand.vmem [shape: f32[1,64], index: 2, kind: input, shape index: {}]
  %s3 = inlined_call_operand.vmem [shape: bf16[64,128], index: 3, kind: input, shape index: {}]
  %s4 = inlined_call_operand.vmem [shape: f32[1,128], index: 4, kind: input, shape index: {}]
  %s5 = inlined_call_operand.hbm [shape: bf16[128,256], index: 5, kind: input, shape index: {}]
  %s6 = inlined_call_operand.vmem [shape: f32[1,256], index: 6, kind: input, shape index: {}]
  %s7 = inlined_call_operand.vmem [shape: bf16[16,256], index: 7, kind: output, shape index: {}]
  %s8 = sld [smem:[#allocation0]]
  $region46: #{decoder_forward.1} parent=0
    _
  %s10 = ssub.s32 1, %s8
  %s11 = scalar_select 0, %s10, %s8
  $region1: #{decoder_forward.1} parent=0
    #allocation2 [shape = 'u8[8192]{0}', space=vmem, size = 0x2000, scoped, tag = 'input window, operand 1, single buffered']
    #allocation3 [shape = 's32[1]{0}', space=sflag, size = 0x4, scoped, tag = 'scoped memory for decoder_forward.1']
    #allocation4 [shape = 'u8[65536]{0}', space=vmem, size = 0x10000, scoped, tag = 'input window, operand 5, single buffered']
    #allocation5 [shape = 's32[1]{0}', space=sflag, size = 0x4, scoped, tag = 'scoped memory for decoder_forward.1']
    %12 = vsyncpa [#allocation3], 0
    %13 = vsyncpa [#allocation5], 0
    // Predicated region
    $region2: #{decoder_forward.1} parent=1 // pred_check
      _
    $region3: #{decoder_forward.1} parent=1 // pred_check_branch
      %15 = sbr.rel (0) target = $region5
    $region4: #{decoder_forward.1} parent=1 // pred_region
      _
    $region5: #{decoder_forward.1} parent=1 // pred_fallthru
      _
    // Predicated region
    $region6: #{decoder_forward.1} parent=1 // pred_check
      _
    $region7: #{decoder_forward.1} parent=1 // pred_check_branch
      %17 = sbr.rel (0) target = $region9
    $region8: #{decoder_forward.1} parent=1 // pred_region
      %s19 = ssub.s32 256, 256
      %20 = vsyncadd [#allocation3], %s19
      %s21 = sshll.u32 [#allocation2], 4
      %s22 = int_to_ptr.vmem [resolvable:$true] %s21
      %27 = dma.hbm_to_vmem [thread:$0]  %s1, 256, %s22, [#allocation3], 64, 64, 4
    $region9: #{decoder_forward.1} parent=1 // pred_fallthru
      _
    // Predicated region
    $region10: #{decoder_forward.1} parent=1 // pred_check
      _
    $region11: #{decoder_forward.1} parent=1 // pred_check_branch
      %29 = sbr.rel (0) target = $region13
    $region12: #{decoder_forward.1} parent=1 // pred_region
      _
    $region13: #{decoder_forward.1} parent=1 // pred_fallthru
      _
    // Predicated region
    $region14: #{decoder_forward.1} parent=1 // pred_check
      _
    $region15: #{decoder_forward.1} parent=1 // pred_check_branch
      %31 = sbr.rel (0) target = $region17
    $region16: #{decoder_forward.1} parent=1 // pred_region
      _
    $region17: #{decoder_forward.1} parent=1 // pred_fallthru
      _
    // Predicated region
    $region18: #{decoder_forward.1} parent=1 // pred_check
      _
    $region19: #{decoder_forward.1} parent=1 // pred_check_branch
      %33 = sbr.rel (0) target = $region21
    $region20: #{decoder_forward.1} parent=1 // pred_region
      _
    $region21: #{decoder_forward.1} parent=1 // pred_fallthru
      _
    // Predicated region
    $region22: #{decoder_forward.1} parent=1 // pred_check
      _
    $region23: #{decoder_forward.1} parent=1 // pred_check_branch
      %35 = sbr.rel (0) target = $region25
    $region24: #{decoder_forward.1} parent=1 // pred_region
      %s37 = ssub.s32 2048, 2048
      %38 = vsyncadd [#allocation5], %s37
      %s39 = sshll.u32 [#allocation4], 4
      %s40 = int_to_ptr.vmem [resolvable:$true] %s39
      %45 = dma.hbm_to_vmem [thread:$0]  %s5, 2048, %s40, [#allocation5], 128, 128, 8
    $region25: #{decoder_forward.1} parent=1 // pred_fallthru
      _
    // Predicated region
    $region26: #{decoder_forward.1} parent=1 // pred_check
      _
    $region27: #{decoder_forward.1} parent=1 // pred_check_branch
      %47 = sbr.rel (0) target = $region29
    $region28: #{decoder_forward.1} parent=1 // pred_region
      _
    $region29: #{decoder_forward.1} parent=1 // pred_fallthru
      _
    // Predicated region
    $region30: #{decoder_forward.1} parent=1 // pred_check
      _
    $region31: #{decoder_forward.1} parent=1 // pred_check_branch
      %49 = sbr.rel (0) target = $region33
    $region32: #{decoder_forward.1} parent=1 // pred_region
      %50 = dma.done [#allocation3], 256
    $region33: #{decoder_forward.1} parent=1 // pred_fallthru
      _
    // Predicated region
    $region34: #{decoder_forward.1} parent=1 // pred_check
      _
    $region35: #{decoder_forward.1} parent=1 // pred_check_branch
      %52 = sbr.rel (0) target = $region37
    $region36: #{decoder_forward.1} parent=1 // pred_region
      %53 = dma.done [#allocation5], 2048
    $region37: #{decoder_forward.1} parent=1 // pred_fallthru
      _
    %v55 = vld [vmem:[%s0] sm:$0xff]
    %v56 = vld [vmem:[%s0 + $0x8] sm:$0xff]
    %v57 = vpack.c.bf16 %v56, %v55
    %v58 = vld [vmem:[#allocation2] sm:$0xf]
    %v59 = vld [vmem:[#allocation2 + $0x4] sm:$0xf]
    %v60 = vld [vmem:[#allocation2 + $0x8] sm:$0xf]
    %v61 = vld [vmem:[#allocation2 + $0xc] sm:$0xf]
    %v62 = vld [vmem:[%s2] sm:$0x1]
    %v64 = vlaneseq
    %v65 = vshrl.u32 %v64, 7
    %v66 = vsub.s32 0, %v65
    %v67 = vrot.slane %v62, %v66
    %v73 = vunpack.c.l.b16 %v58
    %v74 = vunpack.c.l.b16 %v59
    %v75 = vunpack.c.l.b16 %v60
    %v76 = vunpack.c.l.b16 %v61
    %v77 = vpack.c.b16 %v74, %v73
    %v78 = vpack.c.b16 %v76, %v75
    %vm81 = vcmask 261120
    %v83 = vsel %vm81, %v57, 0
    %85 = vmatprep.subr.bf16.mxu0 0
    %86 = vmatpush1.bf16.msra.mxu0 %v77
    %87 = vmatprep.subr.bf16.mxu0 0
    %88 = vmatpush1.bf16.msra.mxu0 %v78
    %89 = vmatprep.subr.bf16.mxu0 0
    %90 = vmatpush1.bf16.msra.mxu0 0
    %91 = vmatprep.subr.bf16.mxu0 0
    %92 = vmatpush1.bf16.msra.mxu0 0
    %93 = vmatprep.subr.bf16.mxu0 0
    %94 = vmatpush1.bf16.msra.mxu0 0
    %95 = vmatprep.subr.bf16.mxu0 0
    %96 = vmatpush1.bf16.msra.mxu0 0
    %97 = vmatprep.subr.bf16.mxu0 0
    %98 = vmatpush1.bf16.msra.mxu0 0
    %99 = vmatprep.subr.bf16.mxu0 0
    %100 = vmatpush1.bf16.msra.mxu0 0
    %101 = vmatprep.subr.bf16.mxu0 0
    %102 = vmatpush1.bf16.msra.mxu0 0
    %103 = vmatprep.subr.bf16.mxu0 0
    %104 = vmatpush1.bf16.msra.mxu0 0
    %105 = vmatprep.subr.bf16.mxu0 0
    %106 = vmatpush1.bf16.msra.mxu0 0
    %107 = vmatprep.subr.bf16.mxu0 0
    %108 = vmatpush1.bf16.msra.mxu0 0
    %109 = vmatprep.subr.bf16.mxu0 0
    %110 = vmatpush1.bf16.msra.mxu0 0
    %111 = vmatprep.subr.bf16.mxu0 0
    %112 = vmatpush1.bf16.msra.mxu0 0
    %113 = vmatprep.subr.bf16.mxu0 0
    %114 = vmatpush1.bf16.msra.mxu0 0
    %115 = vmatprep.subr.bf16.mxu0 0
    %116 = vmatpush1.bf16.msra.mxu0 0
    %117 = vmatprep.mubr.bf16.mxu0 0
    %118 = vmatmul.mubr.bf16.gmra.mrb[0].mxu0 %v83
    %v119 = vpop.f32.mrb[0].mxu0
    %v120 = vadd.f32 %v67, %v119
    %v121 = vpop.f32.mrb[0].mxu0
    %v122 = vpop.f32.mrb[0].mxu0
    %v123 = vadd.f32 %v67, %v122
    %v124 = vpop.f32.mrb[0].mxu0
    %125 = vdwg.mxu0
    %v126 = vmax.f32 %v120, 0.0
    %v127 = vmax.f32 %v123, 0.0
    %v128 = vpack.c.bf16 %v127, %v126
    %v129 = vld [vmem:[%s3] sm:$0xf]
    %v130 = vld [vmem:[%s3 + $0x4] sm:$0xf]
    %v131 = vld [vmem:[%s3 + $0x8] sm:$0xf]
    %v132 = vld [vmem:[%s3 + $0xc] sm:$0xf]
    %v133 = vld [vmem:[%s3 + $0x10] sm:$0xf]
    %v134 = vld [vmem:[%s3 + $0x14] sm:$0xf]
    %v135 = vld [vmem:[%s3 + $0x18] sm:$0xf]
    %v136 = vld [vmem:[%s3 + $0x1c] sm:$0xf]
    %v137 = vld [vmem:[%s4] sm:$0x1]
    %v139 = vlaneseq
    %v140 = vshrl.u32 %v139, 7
    %v141 = vsub.s32 0, %v140
    %v142 = vrot.slane %v137, %v141
    %v152 = vunpack.c.l.b16 %v129
    %v153 = vunpack.c.l.b16 %v130
    %v154 = vunpack.c.l.b16 %v131
    %v155 = vunpack.c.l.b16 %v132
    %v156 = vunpack.c.l.b16 %v133
    %v157 = vunpack.c.l.b16 %v134
    %v158 = vunpack.c.l.b16 %v135
    %v159 = vunpack.c.l.b16 %v136
    %v160 = vpack.c.b16 %v153, %v152
    %v161 = vpack.c.b16 %v155, %v154
    %v162 = vpack.c.b16 %v157, %v156
    %v163 = vpack.c.b16 %v159, %v158
    %vm168 = vcmask 523264
    %v170 = vsel %vm168, %v128, 0
    %172 = vmatprep.subr.bf16.mxu0 0
    %173 = vmatpush1.bf16.msra.mxu0 %v160
    %174 = vmatprep.subr.bf16.mxu0 0
    %175 = vmatpush1.bf16.msra.mxu0 %v161
    %176 = vmatprep.subr.bf16.mxu0 0
    %177 = vmatpush1.bf16.msra.mxu0 %v162
    %178 = vmatprep.subr.bf16.mxu0 0
    %179 = vmatpush1.bf16.msra.mxu0 %v163
    %180 = vmatprep.subr.bf16.mxu0 0
    %181 = vmatpush1.bf16.msra.mxu0 0
    %182 = vmatprep.subr.bf16.mxu0 0
    %183 = vmatpush1.bf16.msra.mxu0 0
    %184 = vmatprep.subr.bf16.mxu0 0
    %185 = vmatpush1.bf16.msra.mxu0 0
    %186 = vmatprep.subr.bf16.mxu0 0
    %187 = vmatpush1.bf16.msra.mxu0 0
    %188 = vmatprep.subr.bf16.mxu0 0
    %189 = vmatpush1.bf16.msra.mxu0 0
    %190 = vmatprep.subr.bf16.mxu0 0
    %191 = vmatpush1.bf16.msra.mxu0 0
    %192 = vmatprep.subr.bf16.mxu0 0
    %193 = vmatpush1.bf16.msra.mxu0 0
    %194 = vmatprep.subr.bf16.mxu0 0
    %195 = vmatpush1.bf16.msra.mxu0 0
    %196 = vmatprep.subr.bf16.mxu0 0
    %197 = vmatpush1.bf16.msra.mxu0 0
    %198 = vmatprep.subr.bf16.mxu0 0
    %199 = vmatpush1.bf16.msra.mxu0 0
    %200 = vmatprep.subr.bf16.mxu0 0
    %201 = vmatpush1.bf16.msra.mxu0 0
    %202 = vmatprep.subr.bf16.mxu0 0
    %203 = vmatpush1.bf16.msra.mxu0 0
    %204 = vmatprep.mubr.bf16.mxu0 0
    %205 = vmatmul.mubr.bf16.gmra.mrb[0].mxu0 %v170
    %v206 = vpop.f32.mrb[0].mxu0
    %v207 = vadd.f32 %v142, %v206
    %v208 = vpop.f32.mrb[0].mxu0
    %v209 = vpop.f32.mrb[0].mxu0
    %v210 = vadd.f32 %v142, %v209
    %v211 = vpop.f32.mrb[0].mxu0
    %212 = vdwg.mxu0
    %v213 = vmax.f32 %v207, 0.0
    %v214 = vmax.f32 %v210, 0.0
    %v215 = vpack.c.bf16 %v214, %v213
    %v216 = vld [vmem:[#allocation4] sm:$0xff]
    %v217 = vld [vmem:[#allocation4 + $0x8] sm:$0xff]
    %v218 = vld [vmem:[#allocation4 + $0x10] sm:$0xff]
    %v219 = vld [vmem:[#allocation4 + $0x18] sm:$0xff]
    %v220 = vld [vmem:[#allocation4 + $0x20] sm:$0xff]
    %v221 = vld [vmem:[#allocation4 + $0x28] sm:$0xff]
    %v222 = vld [vmem:[#allocation4 + $0x30] sm:$0xff]
    %v223 = vld [vmem:[#allocation4 + $0x38] sm:$0xff]
    %v224 = vld [vmem:[#allocation4 + $0x40] sm:$0xff]
    %v225 = vld [vmem:[#allocation4 + $0x48] sm:$0xff]
    %v226 = vld [vmem:[#allocation4 + $0x50] sm:$0xff]
    %v227 = vld [vmem:[#allocation4 + $0x58] sm:$0xff]
    %v228 = vld [vmem:[#allocation4 + $0x60] sm:$0xff]
    %v229 = vld [vmem:[#allocation4 + $0x68] sm:$0xff]
    %v230 = vld [vmem:[#allocation4 + $0x70] sm:$0xff]
    %v231 = vld [vmem:[#allocation4 + $0x78] sm:$0xff]
    %v232 = vld [vmem:[%s6] sm:$0x3]
    %v234 = vlaneseq
    %v235 = vshrl.u32 %v234, 7
    %v236 = vsub.s32 0, %v235
    %v237 = vrot.slane %v232, %v236
    %v238 = vlaneseq
    %v239 = vshrl.u32 %v238, 7
    %v240 = vsub.s32 1, %v239
    %v241 = vrot.slane %v232, %v240
    %v260 = vunpack.c.l.b16 %v216
    %v261 = vunpack.c.h.b16 %v216
    %v262 = vunpack.c.l.b16 %v217
    %v263 = vunpack.c.h.b16 %v217
    %v264 = vunpack.c.l.b16 %v218
    %v265 = vunpack.c.h.b16 %v218
    %v266 = vunpack.c.l.b16 %v219
    %v267 = vunpack.c.h.b16 %v219
    %v268 = vunpack.c.l.b16 %v220
    %v269 = vunpack.c.h.b16 %v220
    %v270 = vunpack.c.l.b16 %v221
    %v271 = vunpack.c.h.b16 %v221
    %v272 = vunpack.c.l.b16 %v222
    %v273 = vunpack.c.h.b16 %v222
    %v274 = vunpack.c.l.b16 %v223
    %v275 = vunpack.c.h.b16 %v223
    %v276 = vunpack.c.l.b16 %v224
    %v277 = vunpack.c.h.b16 %v224
    %v278 = vunpack.c.l.b16 %v225
    %v279 = vunpack.c.h.b16 %v225
    %v280 = vunpack.c.l.b16 %v226
    %v281 = vunpack.c.h.b16 %v226
    %v282 = vunpack.c.l.b16 %v227
    %v283 = vunpack.c.h.b16 %v227
    %v284 = vunpack.c.l.b16 %v228
    %v285 = vunpack.c.h.b16 %v228
    %v286 = vunpack.c.l.b16 %v229
    %v287 = vunpack.c.h.b16 %v229
    %v288 = vunpack.c.l.b16 %v230
    %v289 = vunpack.c.h.b16 %v230
    %v290 = vunpack.c.l.b16 %v231
    %v291 = vunpack.c.h.b16 %v231
    %v292 = vpack.c.b16 %v262, %v260
    %v293 = vpack.c.b16 %v263, %v261
    %v294 = vpack.c.b16 %v266, %v264
    %v295 = vpack.c.b16 %v267, %v265
    %v296 = vpack.c.b16 %v270, %v268
    %v297 = vpack.c.b16 %v271, %v269
    %v298 = vpack.c.b16 %v274, %v272
    %v299 = vpack.c.b16 %v275, %v273
    %v300 = vpack.c.b16 %v278, %v276
    %v301 = vpack.c.b16 %v279, %v277
    %v302 = vpack.c.b16 %v282, %v280
    %v303 = vpack.c.b16 %v283, %v281
    %v304 = vpack.c.b16 %v286, %v284
    %v305 = vpack.c.b16 %v287, %v285
    %v306 = vpack.c.b16 %v290, %v288
    %v307 = vpack.c.b16 %v291, %v289
    %324 = vmatprep.subr.bf16.mxu0 %v293
    %325 = vmatpush1.bf16.msra.mxu0 %v292
    %326 = vmatprep.subr.bf16.mxu0 %v295
    %327 = vmatpush1.bf16.msra.mxu0 %v294
    %328 = vmatprep.subr.bf16.mxu0 %v297
    %329 = vmatpush1.bf16.msra.mxu0 %v296
    %330 = vmatprep.subr.bf16.mxu0 %v299
    %331 = vmatpush1.bf16.msra.mxu0 %v298
    %332 = vmatprep.subr.bf16.mxu0 %v301
    %333 = vmatpush1.bf16.msra.mxu0 %v300
    %334 = vmatprep.subr.bf16.mxu0 %v303
    %335 = vmatpush1.bf16.msra.mxu0 %v302
    %336 = vmatprep.subr.bf16.mxu0 %v305
    %337 = vmatpush1.bf16.msra.mxu0 %v304
    %338 = vmatprep.subr.bf16.mxu0 %v307
    %339 = vmatpush1.bf16.msra.mxu0 %v306
    %340 = vmatprep.subr.bf16.mxu0 0
    %341 = vmatpush1.bf16.msra.mxu0 0
    %342 = vmatprep.subr.bf16.mxu0 0
    %343 = vmatpush1.bf16.msra.mxu0 0
    %344 = vmatprep.subr.bf16.mxu0 0
    %345 = vmatpush1.bf16.msra.mxu0 0
    %346 = vmatprep.subr.bf16.mxu0 0
    %347 = vmatpush1.bf16.msra.mxu0 0
    %348 = vmatprep.subr.bf16.mxu0 0
    %349 = vmatpush1.bf16.msra.mxu0 0
    %350 = vmatprep.subr.bf16.mxu0 0
    %351 = vmatpush1.bf16.msra.mxu0 0
    %352 = vmatprep.subr.bf16.mxu0 0
    %353 = vmatpush1.bf16.msra.mxu0 0
    %354 = vmatprep.subr.bf16.mxu0 0
    %355 = vmatpush1.bf16.msra.mxu0 0
    %356 = vmatprep.mubr.bf16.mxu0 0
    %357 = vmatmul.mubr.bf16.gmra.mrb[0].mxu0 %v215
    %v358 = vpop.f32.mrb[0].mxu0
    %v359 = vadd.f32 %v237, %v358
    %v360 = vpop.f32.mrb[0].mxu0
    %v361 = vadd.f32 %v241, %v360
    %v362 = vpop.f32.mrb[0].mxu0
    %v363 = vadd.f32 %v237, %v362
    %v364 = vpop.f32.mrb[0].mxu0
    %v365 = vadd.f32 %v241, %v364
    %366 = vdwg.mxu0
    %v367 = vmul.f32 %v359, 0.5
    %v368 = vmul.f32 %v361, 0.5
    %v369 = vmul.f32 %v363, 0.5
    %v370 = vmul.f32 %v365, 0.5
    %v371 = vtanh.pop %v367
    %v372 = vtanh.pop %v368
    %v373 = vtanh.pop %v369
    %v374 = vtanh.pop %v370
    %v375 = vadd.f32 %v371, 1.0
    %v376 = vadd.f32 %v372, 1.0
    %v377 = vadd.f32 %v373, 1.0
    %v378 = vadd.f32 %v374, 1.0
    %v379 = vmul.f32 %v375, 0.5
    %v380 = vmul.f32 %v376, 0.5
    %v381 = vmul.f32 %v377, 0.5
    %v382 = vmul.f32 %v378, 0.5
    %v383 = vpack.c.bf16 %v381, %v379
    %v384 = vpack.c.bf16 %v382, %v380
    %v387 = vunpack.c.l.b16 %v383
    %v388 = vunpack.c.l.b16 %v384
    %v389 = vunpack.c.h.b16 %v383
    %v390 = vunpack.c.h.b16 %v384
    %v391 = vpack.c.b16 %v388, %v387
    %v392 = vpack.c.b16 %v390, %v389
    %395 = vst [vmem:[%s7] sm:$0xff] %v391
    %396 = vst [vmem:[%s7 + $0x8] sm:$0xff] %v392
    // Predicated region
    $region38: #{decoder_forward.1} parent=1 // pred_check
      _
    $region39: #{decoder_forward.1} parent=1 // pred_check_branch
      %398 = sbr.rel (0) target = $region41
    $region40: #{decoder_forward.1} parent=1 // pred_region
      _
    $region41: #{decoder_forward.1} parent=1 // pred_fallthru
      _
    // Predicated region
    $region42: #{decoder_forward.1} parent=1 // pred_check
      _
    $region43: #{decoder_forward.1} parent=1 // pred_check_branch
      %400 = sbr.rel (0) target = $region45
    $region44: #{decoder_forward.1} parent=1 // pred_region
      _
    $region45: #{decoder_forward.1} parent=1 // pred_fallthru
      _
    %401 = vsyncpa [#allocation3], 1
    %402 = vsyncpa [#allocation5], 1

</llo_original>
